<compile_context>
chip_gen: v6e
topology: v6e:2x2x1
jax: 0.10.0
libtpu: 0.0.40
codegen_flags: <defaults>
</compile_context>

<pallas_src>
import functools

import jax
import jax.numpy as jnp
from jax.experimental import pallas as pl
from jax.experimental.pallas import tpu as pltpu


def _round_up(a, b):
    return ((a + b - 1) // b) * b


def ffn_kernel(x_ref, w1_ref, b1_ref, w2_ref, b2_ref, o_ref, acc_ref, *, compute_dtype):
    # x_ref : (tm, d_model)  original dtype     w1_ref: (d_model, tf) compute_dtype
    # b1_ref: (1, tf) f32                       w2_ref: (tf, d_model) compute_dtype
    # b2_ref: (1, d_model) f32                  o_ref : (tm, d_model) out dtype
    # acc_ref: (tm, d_model) f32 scratch, accumulates over the d_ff (k) grid axis.
    k = pl.program_id(1)

    @pl.when(k == 0)
    def _init():
        acc_ref[...] = jnp.zeros_like(acc_ref)

    xc = x_ref[...].astype(compute_dtype)                 # per-tile cast (VPU, hidden under MXU)
    h = jnp.dot(xc, w1_ref[...], preferred_element_type=jnp.float32)
    h = jnp.maximum(h + b1_ref[...], 0.0)                 # bias + ReLU in f32 (dropout = identity)
    acc_ref[...] += jnp.dot(h.astype(compute_dtype), w2_ref[...],
                            preferred_element_type=jnp.float32)

    @pl.when(k == pl.num_programs(1) - 1)
    def _finalize():
        o_ref[...] = (acc_ref[...] + b2_ref[...]).astype(o_ref.dtype)


def positionwise_ffn(x, w1, b1, w2, b2, *, tm=512, tf_max=2048,
                     compute_dtype=jnp.bfloat16):
    """x: (B, S, d_model) -> (B, S, d_model).  Weights are (in_dim, out_dim)."""
    B, S, d_model = x.shape
    d_ff = w1.shape[1]
    M = B * S
    out_dtype = x.dtype

    x_itemsize = jnp.dtype(x.dtype).itemsize
    out_itemsize = jnp.dtype(out_dtype).itemsize
    c_itemsize = jnp.dtype(compute_dtype).itemsize

    # ---------------- row (M) tile ----------------
    gran = 256                      # MXU-native on v6e/v7x; multiple of 128 so fine on v5e
    M8 = _round_up(M, 8)
    if M8 >= 2 * gran:
        # Cap the tile so there are always >= 2 row tiles -> v7x's 2 TCs both get work.
        tm_cap = max(gran, _round_up(M8, 2 * gran) // 2)
        tm_eff = min(_round_up(tm, gran), tm_cap)
    else:
        tm_eff = M8                 # tiny input: one 8-aligned tile, no gratuitous padding

    # ---------------- d_ff tile ----------------
    def pick_tf(limit):
        limit = max(128, min(limit, d_ff))
        if d_ff <= limit:
            return d_ff
        t = (limit // 128) * 128
        while t >= 128:
            if d_ff % t == 0:       # must evenly divide d_ff (multiple of 128 for lanes)
                return t
            t -= 128
        return d_ff                 # no good divisor: fall back to untiled d_ff

    tf = pick_tf(tf_max)

    # ---------------- per-generation VMEM budget ----------------
    try:
        phys_vmem = pltpu.get_tpu_info().vmem_capacity_bytes
    except Exception:
        phys_vmem = 64 << 20        # conservative fallback (v7x per-TC VMEM)
    vmem_cap = int(0.85 * phys_vmem)  # leave headroom for Mosaic internal scratch

    def vmem_needed(tm_, tf_):
        x_tile = 2 * tm_ * d_model * x_itemsize          # double-buffered x rows
        w1_tile = 2 * d_model * tf_ * c_itemsize         # double-buffered W1 column block
        w2_tile = 2 * tf_ * d_model * c_itemsize         # double-buffered W2 row block
        b_tiles = 2 * 8 * (tf_ + d_model) * 4            # b1/b2 blocks (sublane-padded)
        out_tile = 2 * tm_ * d_model * out_itemsize      # double-buffered output rows
        acc = tm_ * d_model * 4                          # f32 accumulator scratch
        h_tmp = tm_ * tf_ * (4 + c_itemsize)             # f32 hidden chunk + bf16 copy
        return x_tile + w1_tile + w2_tile + b_tiles + out_tile + acc + h_tmp + (4 << 20)

    # Shrink tf first (keeps M-parallelism), then tm, until the footprint fits.
    while vmem_needed(tm_eff, tf) > vmem_cap:
        new_tf = pick_tf(tf // 2) if tf > 128 else tf
        if new_tf < tf:
            tf = new_tf
            continue
        if tm_eff > gran:
            tm_eff = max(gran, (max(tm_eff // 2, gran) // gran) * gran)
            continue
        if tm_eff > 8:
            tm_eff = max(8, _round_up(tm_eff // 2, 8))
            continue
        break

    M_pad = _round_up(M, tm_eff)
    grid_m = M_pad // tm_eff
    grid_k = d_ff // tf

    # ---------------- operands (no wrapper-side cast of x) ----------------
    x2d = x.reshape(M, d_model)
    if M_pad != M:
        x2d = jnp.pad(x2d, ((0, M_pad - M), (0, 0)))

    # Cast weights only if needed; callers should store params in compute_dtype
    # to make this a no-op and avoid the extra HBM round-trip.
    w1c = w1 if w1.dtype == compute_dtype else w1.astype(compute_dtype)
    w2c = w2 if w2.dtype == compute_dtype else w2.astype(compute_dtype)
    b1_2d = b1.reshape(1, d_ff).astype(jnp.float32)
    b2_2d = b2.reshape(1, d_model).astype(jnp.float32)

    # ---------------- advisory cost estimate ----------------
    flops = 4 * M_pad * d_model * d_ff                   # two matmuls, 2*M*K*N each
    bytes_accessed = (M_pad * d_model * (x_itemsize + out_itemsize)
                      + grid_m * (w1c.size + w2c.size) * c_itemsize
                      + grid_m * (d_ff + d_model) * 4)
    cost = pl.CostEstimate(flops=flops, transcendentals=0,
                           bytes_accessed=bytes_accessed)

    vmem_limit = int(min(max(vmem_needed(tm_eff, tf), 16 << 20), vmem_cap))

    kernel = functools.partial(ffn_kernel, compute_dtype=compute_dtype)

    out2d = pl.pallas_call(
        kernel,
        out_shape=jax.ShapeDtypeStruct((M_pad, d_model), out_dtype),
        grid_spec=pltpu.PrefetchScalarGridSpec(
            num_scalar_prefetch=0,
            grid=(grid_m, grid_k),                       # reduction (d_ff) axis last
            in_specs=[
                pl.BlockSpec((tm_eff, d_model), lambda i, k: (i, 0)),   # x rows (invariant in k)
                pl.BlockSpec((d_model, tf),     lambda i, k: (0, k)),   # W1 column block
                pl.BlockSpec((1, tf),           lambda i, k: (0, k)),   # b1 slice
                pl.BlockSpec((tf, d_model),     lambda i, k: (k, 0)),   # W2 row block
                pl.BlockSpec((1, d_model),      lambda i, k: (0, 0)),   # b2
            ],
            out_specs=pl.BlockSpec((tm_eff, d_model), lambda i, k: (i, 0)),
            scratch_shapes=[pltpu.VMEM((tm_eff, d_model), jnp.float32)],
        ),
        compiler_params=pltpu.CompilerParams(
            dimension_semantics=("parallel", "arbitrary"),
            vmem_limit_bytes=vmem_limit,
        ),
        cost_estimate=cost,
    )(x2d, w1c, b1_2d, w2c, b2_2d)

    return out2d[:M].reshape(B, S, d_model)


if __name__ == "__main__":
    # Small shapes consistent with the module (d_model, d_ff scaled down).
    B, S, d_model, d_ff = 2, 8, 128, 256

    key = jax.random.PRNGKey(0)
    kx, k1, k2, k3, k4 = jax.random.split(key, 5)

    x = jax.random.normal(kx, (B, S, d_model), dtype=jnp.float32)

    # Deterministic parameter init mimicking nn.Linear's uniform(-1/sqrt(fan_in), 1/sqrt(fan_in)).
    bound1 = 1.0 / (d_model ** 0.5)
    bound2 = 1.0 / (d_ff ** 0.5)
    w1 = jax.random.uniform(k1, (d_model, d_ff), jnp.float32, -bound1, bound1)
    b1 = jax.random.uniform(k2, (d_ff,), jnp.float32, -bound1, bound1)
    w2 = jax.random.uniform(k3, (d_ff, d_model), jnp.float32, -bound2, bound2)
    b2 = jax.random.uniform(k4, (d_model,), jnp.float32, -bound2, bound2)

    # tf_max=128 forces 2 steps along the d_ff reduction axis to exercise the accumulator path.
    out = positionwise_ffn(x, w1, b1, w2, b2, tf_max=128)
    out = jax.block_until_ready(out)

    # Reference 1: mirrors the kernel's bf16-compute / f32-accumulate contract.
    x2 = x.reshape(B * S, d_model)
    xb = x2.astype(jnp.bfloat16)
    h_b = jnp.maximum(jnp.dot(xb, w1.astype(jnp.bfloat16),
                              preferred_element_type=jnp.float32) + b1, 0.0)
    ref_bf16 = (jnp.dot(h_b.astype(jnp.bfloat16), w2.astype(jnp.bfloat16),
                        preferred_element_type=jnp.float32) + b2).reshape(B, S, d_model)

    # Reference 2: true f32 forward of the PyTorch module in eval mode (dropout = identity).
    # The kernel is bf16-compute / f32-accumulate, so it matches this only to bf16 precision.
    h_f = jnp.maximum(x2 @ w1 + b1, 0.0)
    ref_f32 = (h_f @ w2 + b2).reshape(B, S, d_model)

    assert out.shape == (B, S, d_model)
    assert out.dtype == x.dtype
    assert jnp.allclose(out, ref_bf16, atol=2e-2, rtol=2e-2)
    assert jnp.allclose(out, ref_f32, atol=5e-2, rtol=5e-2)

    print("KERNEL_OK")
</pallas_src>

<mosaic_0001>
module attributes {stable_mosaic.version = 11 : i64} {
  func.func @ffn_kernel(%arg0: i32, %arg1: i32, %arg2: memref<16x128xf32, #tpu.memory_space<vmem>>, %arg3: memref<128x128xbf16, #tpu.memory_space<vmem>>, %arg4: memref<1x128xf32, #tpu.memory_space<vmem>>, %arg5: memref<128x128xbf16, #tpu.memory_space<vmem>>, %arg6: memref<1x128xf32, #tpu.memory_space<vmem>>, %arg7: memref<16x128xf32, #tpu.memory_space<vmem>>, %arg8: memref<16x128xf32, #tpu.memory_space<vmem>>) attributes {dimension_semantics = [#tpu.dimension_semantics<parallel>, #tpu.dimension_semantics<arbitrary>], iteration_bounds = array<i64: 1, 2>, scalar_prefetch = 0 : i64, scratch_operands = 1 : i64, tpu.core_type = #tpu.core_type<tc>, window_params = [{transform_indices = @transform_0, window_bounds = array<i64: 16, 128>}, {transform_indices = @transform_1, window_bounds = array<i64: 128, 128>}, {transform_indices = @transform_2, window_bounds = array<i64: 1, 128>}, {transform_indices = @transform_3, window_bounds = array<i64: 128, 128>}, {pipeline_mode = #tpu.pipeline_mode<synchronous>, transform_indices = @transform_4, window_bounds = array<i64: 1, 128>}, {transform_indices = @transform_5, window_bounds = array<i64: 16, 128>}]} {
    %c0_i32 = arith.constant 0 : i32
    %0 = arith.cmpi eq, %arg1, %c0_i32 : i32
    %1 = arith.extui %0 : i1 to i32
    %c0_i32_0 = arith.constant 0 : i32
    %2 = arith.cmpi ne, %1, %c0_i32_0 : i32
    scf.if %2 {
      %cst_15 = arith.constant 0.000000e+00 : f32
      %21 = vector.broadcast %cst_15 : f32 to vector<16x128xf32>
      %c0_16 = arith.constant 0 : index
      %c0_17 = arith.constant 0 : index
      %22 = vector.load %arg8[%c0_16, %c0_17] : memref<16x128xf32, #tpu.memory_space<vmem>>, vector<16x128xf32>
      tpu.vector_store %arg8[%c0_16, %c0_17], %21 {strides = array<i32>} : memref<16x128xf32, #tpu.memory_space<vmem>>, vector<16x128xf32>,
    } else {
    }
    %c0 = arith.constant 0 : index
    %c0_1 = arith.constant 0 : index
    %3 = vector.load %arg2[%c0, %c0_1] : memref<16x128xf32, #tpu.memory_space<vmem>>, vector<16x128xf32>
    %4 = arith.truncf %3 : vector<16x128xf32> to vector<16x128xbf16>
    %c0_2 = arith.constant 0 : index
    %c0_3 = arith.constant 0 : index
    %5 = vector.load %arg3[%c0_2, %c0_3] : memref<128x128xbf16, #tpu.memory_space<vmem>>, vector<128x128xbf16>
    %cst = arith.constant dense<0.000000e+00> : vector<16x128xf32>
    %6 = tpu.matmul %4, %5, %cst {dimension_numbers = #tpu.dot_dimension_numbers<[1], [0], [0], [1], [0, 0, 1, 1], [], []>} : vector<16x128xbf16>, vector<128x128xbf16>, vector<16x128xf32> -> vector<16x128xf32>
    %c0_4 = arith.constant 0 : index
    %c0_5 = arith.constant 0 : index
    %7 = vector.load %arg4[%c0_4, %c0_5] : memref<1x128xf32, #tpu.memory_space<vmem>>, vector<1x128xf32>
    %8 = vector.broadcast %7 : vector<1x128xf32> to vector<16x128xf32>
    %9 = arith.addf %6, %8 : vector<16x128xf32>
    %cst_6 = arith.constant 0.000000e+00 : f32
    %10 = vector.broadcast %cst_6 : f32 to vector<16x128xf32>
    %11 = arith.maximumf %9, %10 : vector<16x128xf32>
    %c0_7 = arith.constant 0 : index
    %c0_8 = arith.constant 0 : index
    %12 = vector.load %arg8[%c0_7, %c0_8] : memref<16x128xf32, #tpu.memory_space<vmem>>, vector<16x128xf32>
    %13 = arith.truncf %11 : vector<16x128xf32> to vector<16x128xbf16>
    %c0_9 = arith.constant 0 : index
    %c0_10 = arith.constant 0 : index
    %14 = vector.load %arg5[%c0_9, %c0_10] : memref<128x128xbf16, #tpu.memory_space<vmem>>, vector<128x128xbf16>
    %cst_11 = arith.constant dense<0.000000e+00> : vector<16x128xf32>
    %15 = tpu.matmul %13, %14, %cst_11 {dimension_numbers = #tpu.dot_dimension_numbers<[1], [0], [0], [1], [0, 0, 1, 1], [], []>} : vector<16x128xbf16>, vector<128x128xbf16>, vector<16x128xf32> -> vector<16x128xf32>
    %16 = arith.addf %12, %15 : vector<16x128xf32>
    %c0_12 = arith.constant 0 : index
    %c0_13 = arith.constant 0 : index
    %17 = vector.load %arg8[%c0_12, %c0_13] : memref<16x128xf32, #tpu.memory_space<vmem>>, vector<16x128xf32>
    tpu.vector_store %arg8[%c0_12, %c0_13], %16 {strides = array<i32>} : memref<16x128xf32, #tpu.memory_space<vmem>>, vector<16x128xf32>,
    %c1_i32 = arith.constant 1 : i32
    %18 = arith.cmpi eq, %arg1, %c1_i32 : i32
    %19 = arith.extui %18 : i1 to i32
    %c0_i32_14 = arith.constant 0 : i32
    %20 = arith.cmpi ne, %19, %c0_i32_14 : i32
    scf.if %20 {
      %c0_15 = arith.constant 0 : index
      %c0_16 = arith.constant 0 : index
      %21 = vector.load %arg8[%c0_15, %c0_16] : memref<16x128xf32, #tpu.memory_space<vmem>>, vector<16x128xf32>
      %c0_17 = arith.constant 0 : index
      %c0_18 = arith.constant 0 : index
      %22 = vector.load %arg6[%c0_17, %c0_18] : memref<1x128xf32, #tpu.memory_space<vmem>>, vector<1x128xf32>
      %23 = vector.broadcast %22 : vector<1x128xf32> to vector<16x128xf32>
      %24 = arith.addf %21, %23 : vector<16x128xf32>
      %c0_19 = arith.constant 0 : index
      %c0_20 = arith.constant 0 : index
      %25 = vector.load %arg7[%c0_19, %c0_20] : memref<16x128xf32, #tpu.memory_space<vmem>>, vector<16x128xf32>
      tpu.vector_store %arg7[%c0_19, %c0_20], %24 {strides = array<i32>} : memref<16x128xf32, #tpu.memory_space<vmem>>, vector<16x128xf32>,
    } else {
    }
    return
  }
  func.func @transform_0(%arg0: i32, %arg1: i32) -> (i32, i32) {
    %c0_i32 = arith.constant 0 : i32
    %c0_i32_0 = arith.constant 0 : i32
    return %arg0, %c0_i32 : i32, i32
  }
  func.func @transform_1(%arg0: i32, %arg1: i32) -> (i32, i32) {
    %c0_i32 = arith.constant 0 : i32
    %c0_i32_0 = arith.constant 0 : i32
    return %c0_i32, %arg1 : i32, i32
  }
  func.func @transform_2(%arg0: i32, %arg1: i32) -> (i32, i32) {
    %c0_i32 = arith.constant 0 : i32
    %c0_i32_0 = arith.constant 0 : i32
    return %c0_i32, %arg1 : i32, i32
  }
  func.func @transform_3(%arg0: i32, %arg1: i32) -> (i32, i32) {
    %c0_i32 = arith.constant 0 : i32
    %c0_i32_0 = arith.constant 0 : i32
    return %arg1, %c0_i32 : i32, i32
  }
  func.func @transform_4(%arg0: i32, %arg1: i32) -> (i32, i32) {
    %c0_i32 = arith.constant 0 : i32
    %c0_i32_0 = arith.constant 0 : i32
    %c0_i32_1 = arith.constant 0 : i32
    return %c0_i32, %c0_i32_0 : i32, i32
  }
  func.func @transform_5(%arg0: i32, %arg1: i32) -> (i32, i32) {
    %c0_i32 = arith.constant 0 : i32
    %c0_i32_0 = arith.constant 0 : i32
    return %arg0, %c0_i32 : i32, i32
  }
}

</mosaic_0001>

<llo_original>
// kernel: tpu_custom_call.1
$region0: #{tpu_custom_call.1}
  #allocation0 [shape = 'u32[]', space=smem, size = 0x4, offset = 0x4, fixed_abs, tag = 'smem constant byte address 0x4 - core index']
  #allocation1 [shape = 'u32[144,128]{1,0:T(1,128)}', space=vmem, size = 0x12000, scoped, tag = 'internal scratch']
  #allocation2 [shape = 'f32[16,128]{1,0:T(8,128)}', space=vmem, size = 0x2000, scoped, tag = 'scratch operand']
  %s0 = inlined_call_operand.hbm [shape: f32[16,128], index: 0, kind: input, shape index: {}]
  %s1 = inlined_call_operand.hbm [shape: bf16[128,256], index: 1, kind: input, shape index: {}]
  %s2 = inlined_call_operand.vmem [shape: f32[1,256], index: 2, kind: input, shape index: {}]
  %s3 = inlined_call_operand.hbm [shape: bf16[256,128], index: 3, kind: input, shape index: {}]
  %s4 = inlined_call_operand.vmem [shape: f32[1,128], index: 4, kind: input, shape index: {}]
  %s5 = inlined_call_operand.hbm [shape: f32[16,128], index: 5, kind: output, shape index: {}]
  %s6 = sld [smem:[#allocation0]]
  $region73: #{tpu_custom_call.1} parent=0
    _
  %s8 = ssub.s32 1, %s6
  %s9 = scalar_select 0, %s8, %s6
  $region1: #{tpu_custom_call.1} parent=0
    #allocation3 [shape = 'u8[8192]{0}', space=vmem, size = 0x2000, scoped, tag = 'input window, operand 0, single buffered']
    #allocation4 [shape = 's32[2]{0}', space=sflag, size = 0x8, scoped, tag = 'scoped memory for tpu_custom_call.1']
    #allocation5 [shape = 's32[2]{0}', space=sflag, size = 0x8, scoped, tag = 'scoped memory for tpu_custom_call.1']
    #allocation6 [shape = 'u8[65536]{0}', space=vmem, size = 0x10000, scoped, tag = 'input window, operand 1']
    #allocation7 [shape = 's32[2]{0}', space=sflag, size = 0x8, scoped, tag = 'scoped memory for tpu_custom_call.1']
    #allocation8 [shape = 'u8[65536]{0}', space=vmem, size = 0x10000, scoped, tag = 'input window, operand 3']
    #allocation9 [shape = 'u8[8192]{0}', space=vmem, size = 0x2000, scoped, tag = 'output window, operand 0, single buffered']
    %10 = vsyncpa [#allocation4], 0
    %11 = vsyncpa [#allocation7], 0
    %s12 = scalar_lea.sflag [#allocation7], 1
    %13 = vsyncpa %s12, 0
    %14 = vsyncpa [#allocation5], 0
    loop: start=0, step=1, limit=4
    $region2: #{tpu_custom_call.1} parent=1 // loop_pre_header
      _
    $region3: #{tpu_custom_call.1} parent=1 // loop_header
      %s16 = sphi 0, %s20
      %p17 = scmp.ge.s32.totalorder %s16, 4
      %s23 = sphi 0, %s35
      %s24 = sphi 0, %s31
      %s25 = sphi 0, %s23
      %s26 = sphi 0, %s24
      %s27 = sphi 0, %s25
      %s28 = sphi 0, %s26
      %s38 = sphi 0, %s40
      %s41 = sphi 0, %s38
      %s42 = sphi 0, %s41
      %s58 = sphi 0, %s42
      %s64 = sphi 0, %s66
      %s67 = sphi 0, %s64
      %s68 = sphi 0, %s67
      %s84 = sphi 0, %s68
      %s90 = sphi 0, %s92
      %s93 = sphi 0, %s90
      %s94 = sphi 0, %s93
      %s110 = sphi 0, %s94
      %s116 = sphi 0, %s118
      %s119 = sphi 0, %s116
      %s120 = sphi 0, %s119
      %s136 = sphi 0, %s120
      %s140 = sphi 0, %s140
      %s142 = sphi 0, %s140
      %s143 = sphi 0, %s142
      %s157 = sphi 0, %s143
      %s163 = sphi 0, %s165
      %s166 = sphi 0, %s163
      %s167 = sphi 0, %s166
      %s183 = sphi 0, %s167
    $region4: #{tpu_custom_call.1} parent=1 // loop_header_branch
      %19 = sbr.rel (%p17) target = $region8
    $region5: #{tpu_custom_call.1} parent=1 // loop_body
      %s21 = ssub.s32 %s16, 1
      %s22 = ssub.s32 %s16, 2
      %s29 = sadd.s32 1, %s24
      %p30 = scmp.ge.s32.totalorder %s29, 2
      %s31 = scalar_select %p30, 0, %s29
      %s32 = sadd.s32 1, %s23
      %s33 = scalar_select %p30, %s32, %s23
      %p34 = scmp.ge.s32.totalorder %s33, 1
      %s35 = scalar_select %p34, 0, %s33
      %s36 = ssub.s32 %s23, %s35
      %p37 = scmp.eq.s32.totalorder %s36, 0
      %s39 = sadd.s32 %s38, 1
      %s40 = scalar_select %p37, %s38, %s39
      %p43 = pneg %p37
      %p44 = scmp.eq.s32.totalorder %s16, 1
      %p45 = por %p43, %p44
      %p46 = scmp.ne.s32.totalorder %s38, %s41
      %p47 = scmp.eq.s32.totalorder %s16, 0
      %p48 = por %p46, %p47
      %p49 = scmp.ne.s32.totalorder %s38, %s41
      %p50 = scmp.eq.s32.totalorder %s21, 1
      %p51 = por %p49, %p50
      %p52 = scmp.ne.s32.totalorder %s41, %s42
      %p53 = scmp.eq.s32.totalorder %s21, 0
      %p54 = por %p52, %p53
      %p55 = scmp.ne.s32.totalorder %s41, %s42
      %p56 = scmp.eq.s32.totalorder %s22, 1
      %p57 = por %p55, %p56
      %p59 = scmp.ne.s32.totalorder %s42, %s58
      %p60 = scmp.eq.s32.totalorder %s22, 0
      %p61 = por %p59, %p60
      %s62 = ssub.s32 %s24, %s31
      %p63 = scmp.eq.s32.totalorder %s62, 0
      %s65 = sadd.s32 %s64, 1
      %s66 = scalar_select %p63, %s64, %s65
      %p69 = pneg %p63
      %p70 = scmp.eq.s32.totalorder %s16, 1
      %p71 = por %p69, %p70
      %p72 = scmp.ne.s32.totalorder %s64, %s67
      %p73 = scmp.eq.s32.totalorder %s16, 0
      %p74 = por %p72, %p73
      %p75 = scmp.ne.s32.totalorder %s64, %s67
      %p76 = scmp.eq.s32.totalorder %s21, 1
      %p77 = por %p75, %p76
      %p78 = scmp.ne.s32.totalorder %s67, %s68
      %p79 = scmp.eq.s32.totalorder %s21, 0
      %p80 = por %p78, %p79
      %p81 = scmp.ne.s32.totalorder %s67, %s68
      %p82 = scmp.eq.s32.totalorder %s22, 1
      %p83 = por %p81, %p82
      %p85 = scmp.ne.s32.totalorder %s68, %s84
      %p86 = scmp.eq.s32.totalorder %s22, 0
      %p87 = por %p85, %p86
      %s88 = ssub.s32 %s24, %s31
      %p89 = scmp.eq.s32.totalorder %s88, 0
      %s91 = sadd.s32 %s90, 1
      %s92 = scalar_select %p89, %s90, %s91
      %p95 = pneg %p89
      %p96 = scmp.eq.s32.totalorder %s16, 1
      %p97 = por %p95, %p96
      %p98 = scmp.ne.s32.totalorder %s90, %s93
      %p99 = scmp.eq.s32.totalorder %s16, 0
      %p100 = por %p98, %p99
      %p101 = scmp.ne.s32.totalorder %s90, %s93
      %p102 = scmp.eq.s32.totalorder %s21, 1
      %p103 = por %p101, %p102
      %p104 = scmp.ne.s32.totalorder %s93, %s94
      %p105 = scmp.eq.s32.totalorder %s21, 0
      %p106 = por %p104, %p105
      %p107 = scmp.ne.s32.totalorder %s93, %s94
      %p108 = scmp.eq.s32.totalorder %s22, 1
      %p109 = por %p107, %p108
      %p111 = scmp.ne.s32.totalorder %s94, %s110
      %p112 = scmp.eq.s32.totalorder %s22, 0
      %p113 = por %p111, %p112
      %s114 = ssub.s32 %s24, %s31
      %p115 = scmp.eq.s32.totalorder %s114, 0
      %s117 = sadd.s32 %s116, 1
      %s118 = scalar_select %p115, %s116, %s117
      %p121 = pneg %p115
      %p122 = scmp.eq.s32.totalorder %s16, 1
      %p123 = por %p121, %p122
      %p124 = scmp.ne.s32.totalorder %s116, %s119
      %p125 = scmp.eq.s32.totalorder %s16, 0
      %p126 = por %p124, %p125
      %p127 = scmp.ne.s32.totalorder %s116, %s119
      %p128 = scmp.eq.s32.totalorder %s21, 1
      %p129 = por %p127, %p128
      %p130 = scmp.ne.s32.totalorder %s119, %s120
      %p131 = scmp.eq.s32.totalorder %s21, 0
      %p132 = por %p130, %p131
      %p133 = scmp.ne.s32.totalorder %s119, %s120
      %p134 = scmp.eq.s32.totalorder %s22, 1
      %p135 = por %p133, %p134
      %p137 = scmp.ne.s32.totalorder %s120, %s136
      %p138 = scmp.eq.s32.totalorder %s22, 0
      %p139 = por %p137, %p138
      %s141 = sadd.s32 %s140, 1
      %p144 = scmp.eq.s32.totalorder %s16, 1
      %p145 = scmp.ne.s32.totalorder %s140, %s142
      %p146 = scmp.eq.s32.totalorder %s16, 0
      %p147 = por %p145, %p146
      %p148 = scmp.ne.s32.totalorder %s140, %s142
      %p149 = scmp.eq.s32.totalorder %s21, 1
      %p150 = por %p148, %p149
      %p151 = scmp.ne.s32.totalorder %s142, %s143
      %p152 = scmp.eq.s32.totalorder %s21, 0
      %p153 = por %p151, %p152
      %p154 = scmp.ne.s32.totalorder %s142, %s143
      %p155 = scmp.eq.s32.totalorder %s22, 1
      %p156 = por %p154, %p155
      %p158 = scmp.ne.s32.totalorder %s143, %s157
      %p159 = scmp.eq.s32.totalorder %s22, 0
      %p160 = por %p158, %p159
      %s161 = ssub.s32 %s23, %s35
      %p162 = scmp.eq.s32.totalorder %s161, 0
      %s164 = sadd.s32 %s163, 1
      %s165 = scalar_select %p162, %s163, %s164
      %p168 = pneg %p162
      %p169 = scmp.eq.s32.totalorder %s16, 1
      %p170 = por %p168, %p169
      %p171 = scmp.ne.s32.totalorder %s163, %s166
      %p172 = scmp.eq.s32.totalorder %s16, 0
      %p173 = por %p171, %p172
      %p174 = scmp.ne.s32.totalorder %s163, %s166
      %p175 = scmp.eq.s32.totalorder %s21, 1
      %p176 = por %p174, %p175
      %p177 = scmp.ne.s32.totalorder %s166, %s167
      %p178 = scmp.eq.s32.totalorder %s21, 0
      %p179 = por %p177, %p178
      %p180 = scmp.ne.s32.totalorder %s166, %s167
      %p181 = scmp.eq.s32.totalorder %s22, 1
      %p182 = por %p180, %p181
      %p184 = scmp.ne.s32.totalorder %s167, %s183
      %p185 = scmp.eq.s32.totalorder %s22, 0
      %p186 = por %p184, %p185
      %p187 = scmp.le.s32.totalorder 1, %s16
      %p188 = scmp.lt.s32.totalorder %s16, 3
      %p189 = pnand %p187, %p188
      %p190 = pneg %p189
      // Predicated region
      $region9: #{tpu_custom_call.1} parent=5 // pred_check
        _
      $region10: #{tpu_custom_call.1} parent=5 // pred_check_branch
        %192 = sbr.rel (%p189) target = $region12
      $region11: #{tpu_custom_call.1} parent=5 // pred_region
        %s193 = ssub.s32 %s16, 1
        // Predicated region
        $region13: #{tpu_custom_call.1} parent=11 // pred_check
          %p194 = pneg %p54
        $region14: #{tpu_custom_call.1} parent=11 // pred_check_branch
          %196 = sbr.rel (%p194) target = $region16
        $region15: #{tpu_custom_call.1} parent=11 // pred_region
          %s197 = smul.u32 2, %s25
          %s199 = ssub.s32 256, 256
          %200 = vsyncadd [#allocation4], %s199
          %s201 = smul.addr %s197, 128
          %s202 = scalar_lea.hbm %s0, %s201
          %s203 = sshll.u32 [#allocation3], 4
          %s204 = int_to_ptr.vmem [resolvable:$true] %s203
          %209 = dma.hbm_to_vmem [thread:$0]  %s202, 256, %s204, [#allocation4], 128, 128, 8
        $region16: #{tpu_custom_call.1} parent=11 // pred_fallthru
          _
        // Predicated region
        $region17: #{tpu_custom_call.1} parent=11 // pred_check
          %p210 = pneg %p153
        $region18: #{tpu_custom_call.1} parent=11 // pred_check_branch
          %212 = sbr.rel (%p210) target = $region20
        $region19: #{tpu_custom_call.1} parent=11 // pred_region
          _
        $region20: #{tpu_custom_call.1} parent=11 // pred_fallthru
          _
      $region12: #{tpu_custom_call.1} parent=5 // pred_fallthru
        _
      %p213 = scmp.lt.s32.totalorder %s16, 2
      // Predicated region
      $region21: #{tpu_custom_call.1} parent=5 // pred_check
        %p214 = pneg %p213
      $region22: #{tpu_custom_call.1} parent=5 // pred_check_branch
        %216 = sbr.rel (%p214) target = $region24
      $region23: #{tpu_custom_call.1} parent=5 // pred_region
        // Predicated region
        $region25: #{tpu_custom_call.1} parent=23 // pred_check
          %p217 = pneg %p74
        $region26: #{tpu_custom_call.1} parent=23 // pred_check_branch
          %219 = sbr.rel (%p217) target = $region28
        $region27: #{tpu_custom_call.1} parent=23 // pred_region
          %s220 = sand.u32 %s16, 1
          %s221 = scalar_lea.sflag [#allocation7], %s220
          %s222 = sand.u32 %s64, 1
          %s223 = smul.addr %s222, 64
          %s224 = scalar_lea.vmem [#allocation6], %s223
          %s226 = ssub.s32 1024, 1024
          %227 = vsyncadd %s221, %s226
          %s228 = smul.addr %s24, 64
          %s229 = scalar_lea.hbm %s1, %s228
          %s230 = sshll.u32 %s224, 4
          %s231 = int_to_ptr.vmem [resolvable:$true] %s230
          %236 = dma.hbm_to_vmem [thread:$0]  %s229, 1024, %s231, %s221, 128, 64, 4
        $region28: #{tpu_custom_call.1} parent=23 // pred_fallthru
          _
        // Predicated region
        $region29: #{tpu_custom_call.1} parent=23 // pred_check
          %p237 = pneg %p100
        $region30: #{tpu_custom_call.1} parent=23 // pred_check_branch
          %239 = sbr.rel (%p237) target = $region32
        $region31: #{tpu_custom_call.1} parent=23 // pred_region
          %p240 = scmp.lt.s32.totalorder %s24, 1
          %s241 = scalar_select %p240, %s24, 1
          %s242 = scalar_lea.vmem %s2, %s241
        $region32: #{tpu_custom_call.1} parent=23 // pred_fallthru
          _
        // Predicated region
        $region33: #{tpu_custom_call.1} parent=23 // pred_check
          %p243 = pneg %p126
        $region34: #{tpu_custom_call.1} parent=23 // pred_check_branch
          %245 = sbr.rel (%p243) target = $region36
        $region35: #{tpu_custom_call.1} parent=23 // pred_region
          %s246 = sand.u32 %s16, 1
          %s247 = scalar_lea.sflag [#allocation7], %s246
          %s248 = sand.u32 %s116, 1
          %s249 = smul.addr %s248, 64
          %s250 = scalar_lea.vmem [#allocation8], %s249
          %s251 = smul.u32 16, %s24
          %s253 = ssub.s32 1024, 1024
          %254 = vsyncadd %s247, %s253
          %s255 = smul.addr %s251, 64
          %s256 = scalar_lea.hbm %s3, %s255
          %s257 = sshll.u32 %s250, 4
          %s258 = int_to_ptr.vmem [resolvable:$true] %s257
          %263 = dma.hbm_to_vmem [thread:$0]  %s256, 1024, %s258, %s247, 64, 64, 4
        $region36: #{tpu_custom_call.1} parent=23 // pred_fallthru
          _
      $region24: #{tpu_custom_call.1} parent=5 // pred_fallthru
        _
      %p264 = scmp.le.s32.totalorder 1, %s16
      %p265 = scmp.lt.s32.totalorder %s16, 3
      %p266 = pnand %p264, %p265
      %p267 = pneg %p266
      // Predicated region
      $region37: #{tpu_custom_call.1} parent=5 // pred_check
        _
      $region38: #{tpu_custom_call.1} parent=5 // pred_check_branch
        %269 = sbr.rel (%p266) target = $region40
      $region39: #{tpu_custom_call.1} parent=5 // pred_region
        %s270 = ssub.s32 %s16, 1
        // Predicated region
        $region41: #{tpu_custom_call.1} parent=39 // pred_check
          %p271 = pneg %p54
        $region42: #{tpu_custom_call.1} parent=39 // pred_check_branch
          %273 = sbr.rel (%p271) target = $region44
        $region43: #{tpu_custom_call.1} parent=39 // pred_region
          %274 = dma.done [#allocation4], 256
        $region44: #{tpu_custom_call.1} parent=39 // pred_fallthru
          _
        %s275 = sand.u32 %s21, 1
        %s276 = scalar_lea.sflag [#allocation7], %s275
        %s277 = sand.u32 %s67, 1
        %s278 = smul.addr %s277, 64
        %s279 = scalar_lea.vmem [#allocation6], %s278
        // Predicated region
        $region45: #{tpu_custom_call.1} parent=39 // pred_check
          %p280 = pneg %p80
        $region46: #{tpu_custom_call.1} parent=39 // pred_check_branch
          %282 = sbr.rel (%p280) target = $region48
        $region47: #{tpu_custom_call.1} parent=39 // pred_region
          %283 = dma.done %s276, 1024
        $region48: #{tpu_custom_call.1} parent=39 // pred_fallthru
          _
        %s284 = sand.u32 %s21, 1
        %s285 = scalar_lea.sflag [#allocation7], %s284
        %s286 = sand.u32 %s119, 1
        %s287 = smul.addr %s286, 64
        %s288 = scalar_lea.vmem [#allocation8], %s287
        // Predicated region
        $region49: #{tpu_custom_call.1} parent=39 // pred_check
          %p289 = pneg %p132
        $region50: #{tpu_custom_call.1} parent=39 // pred_check_branch
          %291 = sbr.rel (%p289) target = $region52
        $region51: #{tpu_custom_call.1} parent=39 // pred_region
          %292 = dma.done %s285, 1024
        $region52: #{tpu_custom_call.1} parent=39 // pred_fallthru
          _
        %p293 = pneg %p54
        %p294 = pneg %p51
        %s295 = sand.u32 %s21, 1
        %s296 = scalar_lea.sflag [#allocation7], %s295
        %s297 = sand.u32 %s67, 1
        %s298 = smul.addr %s297, 64
        %s299 = scalar_lea.vmem [#allocation6], %s298
        %p300 = pneg %p80
        %p301 = pneg %p77
        %p302 = scmp.lt.s32.totalorder %s26, 1
        %s303 = scalar_select %p302, %s26, 1
        %s304 = scalar_lea.vmem %s2, %s303
        %p305 = pneg %p106
        %p306 = pneg %p103
        %s307 = sand.u32 %s21, 1
        %s308 = scalar_lea.sflag [#allocation7], %s307
        %s309 = sand.u32 %s119, 1
        %s310 = smul.addr %s309, 64
        %s311 = scalar_lea.vmem [#allocation8], %s310
        %p312 = pneg %p132
        %p313 = pneg %p129
        %p314 = pneg %p153
        %p315 = pneg %p150
        %p316 = pneg %p179
        %p317 = pneg %p176
        %s318 = smul.u32 2, %s25
        %p319 = scmp.lt.s32.totalorder %s26, 1
        %s320 = scalar_select %p319, %s26, 1
        %s321 = scalar_lea.vmem %s2, %s320
        %s322 = smul.u32 16, %s26
        %s323 = smul.u32 2, %s25
        %p325 = scmp.eq.s32.totalorder %s26, 0
        // Predicated region
        $region53: #{tpu_custom_call.1} parent=39 // pred_check
          %p326 = pneg %p325
        $region54: #{tpu_custom_call.1} parent=39 // pred_check_branch
          %328 = sbr.rel (%p326) target = $region56
        $region55: #{tpu_custom_call.1} parent=39 // pred_region
          %329 = vst [vmem:[#allocation2] sm:$0xff] 0.0
          %330 = vst [vmem:[#allocation2 + $0x8] sm:$0xff] 0.0
        $region56: #{tpu_custom_call.1} parent=39 // pred_fallthru
          _
        %v331 = vld [vmem:[#allocation3] sm:$0xff]
        %v332 = vld [vmem:[#allocation3 + $0x8] sm:$0xff]
        %v333 = vpack.c.bf16 %v332, %v331
        %v334 = vld [vmem:[%s279] sm:$0xf]
        %v335 = vld [vmem:[%s279 + $0x4] sm:$0xf]
        %v336 = vld [vmem:[%s279 + $0x8] sm:$0xf]
        %v337 = vld [vmem:[%s279 + $0xc] sm:$0xf]
        %v338 = vld [vmem:[%s279 + $0x10] sm:$0xf]
        %v339 = vld [vmem:[%s279 + $0x14] sm:$0xf]
        %v340 = vld [vmem:[%s279 + $0x18] sm:$0xf]
        %v341 = vld [vmem:[%s279 + $0x1c] sm:$0xf]
        %v342 = vld [vmem:[%s279 + $0x20] sm:$0xf]
        %v343 = vld [vmem:[%s279 + $0x24] sm:$0xf]
        %v344 = vld [vmem:[%s279 + $0x28] sm:$0xf]
        %v345 = vld [vmem:[%s279 + $0x2c] sm:$0xf]
        %v346 = vld [vmem:[%s279 + $0x30] sm:$0xf]
        %v347 = vld [vmem:[%s279 + $0x34] sm:$0xf]
        %v348 = vld [vmem:[%s279 + $0x38] sm:$0xf]
        %v349 = vld [vmem:[%s279 + $0x3c] sm:$0xf]
        %v350 = vld [vmem:[%s321] sm:$0x1]
        %v352 = vlaneseq
        %v353 = vshrl.u32 %v352, 7
        %v354 = vsub.s32 0, %v353
        %v355 = vrot.slane %v350, %v354
        %v373 = vunpack.c.l.b16 %v334
        %v374 = vunpack.c.l.b16 %v335
        %v375 = vunpack.c.l.b16 %v336
        %v376 = vunpack.c.l.b16 %v337
        %v377 = vunpack.c.l.b16 %v338
        %v378 = vunpack.c.l.b16 %v339
        %v379 = vunpack.c.l.b16 %v340
        %v380 = vunpack.c.l.b16 %v341
        %v381 = vunpack.c.l.b16 %v342
        %v382 = vunpack.c.l.b16 %v343
        %v383 = vunpack.c.l.b16 %v344
        %v384 = vunpack.c.l.b16 %v345
        %v385 = vunpack.c.l.b16 %v346
        %v386 = vunpack.c.l.b16 %v347
        %v387 = vunpack.c.l.b16 %v348
        %v388 = vunpack.c.l.b16 %v349
        %v389 = vpack.c.b16 %v374, %v373
        %v390 = vpack.c.b16 %v376, %v375
        %v391 = vpack.c.b16 %v378, %v377
        %v392 = vpack.c.b16 %v380, %v379
        %v393 = vpack.c.b16 %v382, %v381
        %v394 = vpack.c.b16 %v384, %v383
        %v395 = vpack.c.b16 %v386, %v385
        %v396 = vpack.c.b16 %v388, %v387
        %405 = vmatprep.subr.bf16.mxu0 0
        %406 = vmatpush1.bf16.msra.mxu0 %v396
        %407 = vmatprep.subr.bf16.mxu0 0
        %408 = vmatpush1.bf16.msra.mxu0 %v395
        %409 = vmatprep.subr.bf16.mxu0 0
        %410 = vmatpush1.bf16.msra.mxu0 %v394
        %411 = vmatprep.subr.bf16.mxu0 0
        %412 = vmatpush1.bf16.msra.mxu0 %v393
        %413 = vmatprep.subr.bf16.mxu0 0
        %414 = vmatpush1.bf16.msra.mxu0 %v392
        %415 = vmatprep.subr.bf16.mxu0 0
        %416 = vmatpush1.bf16.msra.mxu0 %v391
        %417 = vmatprep.subr.bf16.mxu0 0
        %418 = vmatpush1.bf16.msra.mxu0 %v390
        %419 = vmatprep.subr.bf16.mxu0 0
        %420 = vmatpush1.bf16.msra.mxu0 %v389
        %421 = vmatprep.subr.bf16.mxu0 0
        %422 = vmatpush2.bf16.msra.mxu0 0
        %423 = vmatprep.subr.bf16.mxu0 0
        %424 = vmatpush2.bf16.msra.mxu0 0
        %425 = vmatprep.subr.bf16.mxu0 0
        %426 = vmatpush2.bf16.msra.mxu0 0
        %427 = vmatprep.subr.bf16.mxu0 0
        %428 = vmatpush2.bf16.msra.mxu0 0
        %429 = vmatprep.subr.bf16.mxu0 0
        %430 = vmatpush2.bf16.msra.mxu0 0
        %431 = vmatprep.subr.bf16.mxu0 0
        %432 = vmatpush2.bf16.msra.mxu0 0
        %433 = vmatprep.subr.bf16.mxu0 0
        %434 = vmatpush2.bf16.msra.mxu0 0
        %435 = vmatprep.subr.bf16.mxu0 0
        %436 = vmatpush2.bf16.msra.mxu0 0
        %437 = vmatprep.mubr.bf16.mxu0 0
        %438 = vmatmul.mubr.bf16.gmra.mxu0 %v333
        %v439 = vpop.f32.mrf.mxu0
        %v440 = vadd.f32 %v355, %v439
        %v441 = vpop.f32.mrf.mxu0
        %v442 = vpop.f32.mrf.mxu0
        %v443 = vadd.f32 %v355, %v442
        %v444 = vpop.f32.mrf.mxu0
        %445 = vdwg.mxu0
        %v446 = vmax.f32 %v440, 0.0
        %v447 = vmax.f32 %v443, 0.0
        %v448 = vld [vmem:[#allocation2] sm:$0xff]
        %v449 = vld [vmem:[#allocation2 + $0x8] sm:$0xff]
        %v450 = vpack.c.bf16 %v447, %v446
        %v451 = vld [vmem:[%s288] sm:$0xf]
        %v452 = vld [vmem:[%s288 + $0x4] sm:$0xf]
        %v453 = vld [vmem:[%s288 + $0x8] sm:$0xf]
        %v454 = vld [vmem:[%s288 + $0xc] sm:$0xf]
        %v455 = vld [vmem:[%s288 + $0x10] sm:$0xf]
        %v456 = vld [vmem:[%s288 + $0x14] sm:$0xf]
        %v457 = vld [vmem:[%s288 + $0x18] sm:$0xf]
        %v458 = vld [vmem:[%s288 + $0x1c] sm:$0xf]
        %v459 = vld [vmem:[%s288 + $0x20] sm:$0xf]
        %v460 = vld [vmem:[%s288 + $0x24] sm:$0xf]
        %v461 = vld [vmem:[%s288 + $0x28] sm:$0xf]
        %v462 = vld [vmem:[%s288 + $0x2c] sm:$0xf]
        %v463 = vld [vmem:[%s288 + $0x30] sm:$0xf]
        %v464 = vld [vmem:[%s288 + $0x34] sm:$0xf]
        %v465 = vld [vmem:[%s288 + $0x38] sm:$0xf]
        %v466 = vld [vmem:[%s288 + $0x3c] sm:$0xf]
        %v483 = vunpack.c.l.b16 %v451
        %v484 = vunpack.c.l.b16 %v452
        %v485 = vunpack.c.l.b16 %v453
        %v486 = vunpack.c.l.b16 %v454
        %v487 = vunpack.c.l.b16 %v455
        %v488 = vunpack.c.l.b16 %v456
        %v489 = vunpack.c.l.b16 %v457
        %v490 = vunpack.c.l.b16 %v458
        %v491 = vunpack.c.l.b16 %v459
        %v492 = vunpack.c.l.b16 %v460
        %v493 = vunpack.c.l.b16 %v461
        %v494 = vunpack.c.l.b16 %v462
        %v495 = vunpack.c.l.b16 %v463
        %v496 = vunpack.c.l.b16 %v464
        %v497 = vunpack.c.l.b16 %v465
        %v498 = vunpack.c.l.b16 %v466
        %v499 = vpack.c.b16 %v484, %v483
        %v500 = vpack.c.b16 %v486, %v485
        %v501 = vpack.c.b16 %v488, %v487
        %v502 = vpack.c.b16 %v490, %v489
        %v503 = vpack.c.b16 %v492, %v491
        %v504 = vpack.c.b16 %v494, %v493
        %v505 = vpack.c.b16 %v496, %v495
        %v506 = vpack.c.b16 %v498, %v497
        %515 = vmatprep.subr.bf16.mxu0 0
        %516 = vmatpush1.bf16.msra.mxu0 %v506
        %517 = vmatprep.subr.bf16.mxu0 0
        %518 = vmatpush1.bf16.msra.mxu0 %v505
        %519 = vmatprep.subr.bf16.mxu0 0
        %520 = vmatpush1.bf16.msra.mxu0 %v504
        %521 = vmatprep.subr.bf16.mxu0 0
        %522 = vmatpush1.bf16.msra.mxu0 %v503
        %523 = vmatprep.subr.bf16.mxu0 0
        %524 = vmatpush1.bf16.msra.mxu0 %v502
        %525 = vmatprep.subr.bf16.mxu0 0
        %526 = vmatpush1.bf16.msra.mxu0 %v501
        %527 = vmatprep.subr.bf16.mxu0 0
        %528 = vmatpush1.bf16.msra.mxu0 %v500
        %529 = vmatprep.subr.bf16.mxu0 0
        %530 = vmatpush1.bf16.msra.mxu0 %v499
        %531 = vmatprep.subr.bf16.mxu0 0
        %532 = vmatpush2.bf16.msra.mxu0 0
        %533 = vmatprep.subr.bf16.mxu0 0
        %534 = vmatpush2.bf16.msra.mxu0 0
        %535 = vmatprep.subr.bf16.mxu0 0
        %536 = vmatpush2.bf16.msra.mxu0 0
        %537 = vmatprep.subr.bf16.mxu0 0
        %538 = vmatpush2.bf16.msra.mxu0 0
        %539 = vmatprep.subr.bf16.mxu0 0
        %540 = vmatpush2.bf16.msra.mxu0 0
        %541 = vmatprep.subr.bf16.mxu0 0
        %542 = vmatpush2.bf16.msra.mxu0 0
        %543 = vmatprep.subr.bf16.mxu0 0
        %544 = vmatpush2.bf16.msra.mxu0 0
        %545 = vmatprep.subr.bf16.mxu0 0
        %546 = vmatpush2.bf16.msra.mxu0 0
        %547 = vmatprep.mubr.bf16.mxu0 0
        %548 = vmatmul.mubr.bf16.gmra.mxu0 %v450
        %v549 = vpop.f32.mrf.mxu0
        %v550 = vadd.f32 0.0, %v549
        %v551 = vpop.f32.mrf.mxu0
        %v552 = vpop.f32.mrf.mxu0
        %v553 = vadd.f32 0.0, %v552
        %v554 = vpop.f32.mrf.mxu0
        %555 = vdwg.mxu0
        %v556 = vadd.f32 %v448, %v550
        %v557 = vadd.f32 %v449, %v553
        %558 = vst [vmem:[#allocation2] sm:$0xff] %v556
        %559 = vst [vmem:[#allocation2 + $0x8] sm:$0xff] %v557
        %p560 = scmp.eq.s32.totalorder %s26, 1
        // Predicated region
        $region57: #{tpu_custom_call.1} parent=39 // pred_check
          %p561 = pneg %p560
        $region58: #{tpu_custom_call.1} parent=39 // pred_check_branch
          %563 = sbr.rel (%p561) target = $region60
        $region59: #{tpu_custom_call.1} parent=39 // pred_region
          %v564 = vld [vmem:[#allocation2] sm:$0xff]
          %v565 = vld [vmem:[#allocation2 + $0x8] sm:$0xff]
          %v566 = vld [vmem:[%s4] sm:$0x1]
          %v568 = vlaneseq
          %v569 = vshrl.u32 %v568, 7
          %v570 = vsub.s32 0, %v569
          %v571 = vrot.slane %v566, %v570
          %v573 = vadd.f32 %v564, %v571
          %v574 = vadd.f32 %v565, %v571
          %575 = vst [vmem:[#allocation9] sm:$0xff] %v573
          %576 = vst [vmem:[#allocation9 + $0x8] sm:$0xff] %v574
        $region60: #{tpu_custom_call.1} parent=39 // pred_fallthru
          _
        // Predicated region
        $region61: #{tpu_custom_call.1} parent=39 // pred_check
          %p577 = pneg %p176
        $region62: #{tpu_custom_call.1} parent=39 // pred_check_branch
          %579 = sbr.rel (%p577) target = $region64
        $region63: #{tpu_custom_call.1} parent=39 // pred_region
          %s580 = smul.u32 2, %s25
          %s582 = ssub.s32 256, 256
          %583 = vsyncadd [#allocation5], %s582
          %s584 = smul.addr %s580, 128
          %s585 = scalar_lea.hbm %s5, %s584
          %s586 = sshll.u32 [#allocation9], 4
          %s587 = int_to_ptr.vmem [resolvable:$true] %s586
          %592 = dma.vmem_to_hbm [thread:$0]  %s587, 256, %s585, [#allocation5], 128, 128, 8
        $region64: #{tpu_custom_call.1} parent=39 // pred_fallthru
          _
        // Predicated region
        $region65: #{tpu_custom_call.1} parent=39 // pred_check
          %p593 = pneg %p176
        $region66: #{tpu_custom_call.1} parent=39 // pred_check_branch
          %595 = sbr.rel (%p593) target = $region68
        $region67: #{tpu_custom_call.1} parent=39 // pred_region
          %596 = dma.done [#allocation5], 256
        $region68: #{tpu_custom_call.1} parent=39 // pred_fallthru
          _
      $region40: #{tpu_custom_call.1} parent=5 // pred_fallthru
        _
      %p597 = scmp.le.s32.totalorder 2, %s16
      // Predicated region
      $region69: #{tpu_custom_call.1} parent=5 // pred_check
        %p598 = pneg %p597
      $region70: #{tpu_custom_call.1} parent=5 // pred_check_branch
        %600 = sbr.rel (%p598) target = $region72
      $region71: #{tpu_custom_call.1} parent=5 // pred_region
        %s601 = ssub.s32 %s16, 2
      $region72: #{tpu_custom_call.1} parent=5 // pred_fallthru
        _
    $region6: #{tpu_custom_call.1} parent=1 // loop_footer
      %s20 = sadd.s32 1, %s16
    $region7: #{tpu_custom_call.1} parent=1 // loop_footer_branch
      %15 = sbr.rel target = $region3
    $region8: #{tpu_custom_call.1} parent=1 // loop_exit
      _
    %602 = vsyncpa [#allocation4], 1
    %s603 = scalar_lea.sflag [#allocation4], 1
    %604 = vsyncpa %s603, 1
    %605 = vsyncpa [#allocation7], 1
    %s606 = scalar_lea.sflag [#allocation7], 1
    %607 = vsyncpa %s606, 1
    %608 = vsyncpa [#allocation5], 1
    %s609 = scalar_lea.sflag [#allocation5], 1
    %610 = vsyncpa %s609, 1

</llo_original>
